<compile_context>
chip_gen: v7x
topology: tpu7x:2x2x1
jax: 0.10.0
libtpu: 0.0.40
codegen_flags: <defaults>
</compile_context>

<pallas_src>
import jax
import jax.numpy as jnp
from jax.experimental import pallas as pl
from jax.experimental.pallas import tpu as pltpu


def _round_up(a: int, b: int) -> int:
    return (a + b - 1) // b * b


# -----------------------------------------------------------------------------
# One-time parameter setup (NOT the hot path): algebraic fusion of
#   g: x @ inv(W).T     Linear: @ W_lin.T + b     f: @ W.T
# into a single weight / bias.  compute_dtype=bf16 feeds the MXU; pass
# jnp.float32 for ill-conditioned global_W if quantization error matters.
# -----------------------------------------------------------------------------
def fuse_incubation_params(global_W, w_lin, b_lin, *, compute_dtype=jnp.bfloat16):
    w_inv_t = jnp.linalg.inv(global_W).T                                    # g()
    w_fused = jnp.matmul(
        jnp.matmul(w_inv_t, w_lin.T, precision="highest"),
        global_W.T, precision="highest")                                    # (H, H)
    b_fused = jnp.matmul(b_lin.reshape(1, -1), global_W.T,
                         precision="highest")                               # (1, H)
    return w_fused.astype(compute_dtype), b_fused.astype(jnp.float32)


def _incubation_kernel(x_ref, w_ref, b_ref, o_ref):
    # Cast x on the VPU right before the MXU; f32 accumulate; f32 bias add.
    x = x_ref[...].astype(w_ref.dtype)
    acc = jnp.dot(x, w_ref[...], preferred_element_type=jnp.float32)
    o_ref[...] = (acc + b_ref[...]).astype(o_ref.dtype)


def incubation_forward(x, w_fused, b_fused, *, tm: int = 512, out_dtype=None,
                       min_pallas_hidden: int = 256):
    """Fused IncubationLayer forward: out = x @ w_fused + b_fused.

    x: [..., H] (typically f32); w_fused: [H, H] (bf16 or f32); b_fused: [H] f32.
    """
    *lead, H = x.shape
    M = 1
    for d in lead:
        M *= d
    out_dtype = out_dtype if out_dtype is not None else x.dtype
    x2d = x.reshape(M, H)
    b2d = b_fused.reshape(1, H).astype(jnp.float32)

    # ---- tiny problem: plain XLA beats launch / MXU-padding overhead --------
    if H < min_pallas_hidden or M < 16:
        acc = jnp.dot(x2d.astype(w_fused.dtype), w_fused,
                      preferred_element_type=jnp.float32) + b2d
        return acc.astype(out_dtype).reshape(x.shape)

    # ---- generation-aware VMEM budget ----------------------------------------
    try:
        vmem_cap = int(pltpu.get_tpu_info().vmem_capacity_bytes)
    except Exception:
        vmem_cap = 64 << 20                    # conservative: v7x per-TC VMEM
    vmem_budget = vmem_cap - (8 << 20)         # headroom for Mosaic internals

    xb = x2d.dtype.itemsize                    # x streamed in its HBM dtype
    wb = jnp.dtype(w_fused.dtype).itemsize
    ob = jnp.dtype(out_dtype).itemsize

    # ---- N tiling: keep weight resident when it fits, else tile N (v7x/huge H)
    if H * H * wb <= vmem_budget // 2:
        tn_eff, w_bufs = H, 1                  # resident, single-buffered
    elif H % 128 == 0:
        w_bufs = 2
        tn_eff = max(128, min(1024,
                              (vmem_budget // 2) // (w_bufs * H * wb) // 128 * 128))
    else:
        # TODO(synk): lane-unaligned H too large for VMEM residency would need
        #             padded N/K tiling; not expected in practice.
        tn_eff, w_bufs = H, 2
    num_n = pl.cdiv(H, tn_eff)

    # ---- M tiling: fit remaining VMEM, >=2 steps (v7x megacore), balanced tail
    stream_budget = vmem_budget - w_bufs * (H * tn_eff * wb + 8 * tn_eff * 4)
    tm_cap = max(8, stream_budget // (2 * H * xb + 2 * tn_eff * ob) // 8 * 8)
    tm_eff = min(tm, tm_cap, max(8, (M // 8) * 8))
    if M >= 16:
        tm_eff = min(tm_eff, _round_up(pl.cdiv(M, 2), 8))   # >=2 parallel M steps
    tm_eff = max(8, min(tm_eff, _round_up(pl.cdiv(M, pl.cdiv(M, tm_eff)), 8)))
    num_m = pl.cdiv(M, tm_eff)

    if num_n == 1:
        # Constant index_map: single-buffer the resident weight / bias.
        w_spec = pl.BlockSpec((H, tn_eff), lambda i, j: (0, j),
                              pipeline_mode=pl.Buffered(1))
        b_spec = pl.BlockSpec((1, tn_eff), lambda i, j: (0, j),
                              pipeline_mode=pl.Buffered(1))
    else:
        w_spec = pl.BlockSpec((H, tn_eff), lambda i, j: (0, j))
        b_spec = pl.BlockSpec((1, tn_eff), lambda i, j: (0, j))

    # Exact VMEM plan (+ floor / headroom), never above physical capacity.
    vmem_needed = (2 * tm_eff * H * xb                    # x tiles (double-buffered)
                   + 2 * tm_eff * tn_eff * ob             # out tiles (double-buffered)
                   + w_bufs * H * tn_eff * wb             # fused weight
                   + w_bufs * 8 * _round_up(tn_eff, 128) * 4)   # bias (tile-padded)
    vmem_limit = int(min(max(vmem_needed + (4 << 20), 16 << 20), vmem_cap))

    cost = pl.CostEstimate(
        flops=2 * M * H * H,
        transcendentals=0,
        bytes_accessed=int(M * H * xb
                           + (num_m if num_n > 1 else 1) * H * H * wb
                           + M * H * ob),
    )

    out2d = pl.pallas_call(
        _incubation_kernel,
        out_shape=jax.ShapeDtypeStruct((M, H), out_dtype),
        grid=(num_m, num_n),
        in_specs=[
            pl.BlockSpec((tm_eff, H), lambda i, j: (i, 0)),   # x: tiled over M
            w_spec,                                           # fused weight
            b_spec,                                           # fused bias
        ],
        out_specs=pl.BlockSpec((tm_eff, tn_eff), lambda i, j: (i, j)),
        compiler_params=pltpu.CompilerParams(
            dimension_semantics=("parallel", "parallel"),
            vmem_limit_bytes=vmem_limit,
        ),
        cost_estimate=cost,
    )(x2d, w_fused, b2d)

    return out2d.reshape(x.shape)


def incubation_reference(x, global_W, w_lin, b_lin):
    """Pure-JAX f32 reference mirroring the PyTorch forward (un-fused)."""
    h = jnp.matmul(x, jnp.linalg.inv(global_W).T, precision="highest")   # g
    h = jnp.matmul(h, w_lin.T, precision="highest") + b_lin              # nn.Linear
    return jnp.matmul(h, global_W.T, precision="highest")                # f


if __name__ == "__main__":
    key = jax.random.PRNGKey(0)
    kx, kw, klin, kb = jax.random.split(key, 4)

    # --- Pallas path: lane-aligned hidden, small batch/seq --------------------
    B, S, H = 2, 8, 512
    x = jax.random.normal(kx, (B, S, H), dtype=jnp.float32)
    # Well-conditioned global_W so inv() is stable (perturbation spectral
    # norm ~0.5 independent of H).
    global_W = jnp.eye(H, dtype=jnp.float32) + (0.25 / jnp.sqrt(H)) * (
        jax.random.normal(kw, (H, H), dtype=jnp.float32))
    w_lin = jax.random.normal(klin, (H, H), dtype=jnp.float32) / jnp.sqrt(H)
    b_lin = 0.1 * jax.random.normal(kb, (H,), dtype=jnp.float32)

    # Parameter fusion hoisted out of the forward (runs once per param update).
    w_fused, b_fused = fuse_incubation_params(global_W, w_lin, b_lin)

    out = jax.block_until_ready(incubation_forward(x, w_fused, b_fused))
    ref = incubation_reference(x, global_W, w_lin, b_lin)
    assert out.shape == (B, S, H)
    # Tolerance loosened for bf16 MXU inputs + re-associated (fused) matmuls.
    assert jnp.allclose(out, ref, atol=5e-2, rtol=5e-2), "Pallas path mismatch"

    # --- tiny-H path (the original H=32 demo shape) uses the XLA fallback -----
    Ht = 32
    xt = jax.random.normal(kx, (2, 8, Ht), dtype=jnp.float32)
    gWt = jnp.eye(Ht, dtype=jnp.float32) + (0.25 / jnp.sqrt(Ht)) * (
        jax.random.normal(kw, (Ht, Ht), dtype=jnp.float32))
    wlt = jax.random.normal(klin, (Ht, Ht), dtype=jnp.float32) / jnp.sqrt(Ht)
    blt = 0.1 * jax.random.normal(kb, (Ht,), dtype=jnp.float32)
    wft, bft = fuse_incubation_params(gWt, wlt, blt)
    out_t = jax.block_until_ready(incubation_forward(xt, wft, bft))
    ref_t = incubation_reference(xt, gWt, wlt, blt)
    assert out_t.shape == (2, 8, Ht)
    assert jnp.allclose(out_t, ref_t, atol=5e-2, rtol=5e-2), "fallback mismatch"

    print("KERNEL_OK")
</pallas_src>

<mosaic_0001>
module attributes {stable_mosaic.version = 11 : i64} {
  func.func @_incubation_kernel(%arg0: i32, %arg1: i32, %arg2: memref<8x512xf32, #tpu.memory_space<vmem>>, %arg3: memref<512x512xbf16, #tpu.memory_space<vmem>>, %arg4: memref<1x512xf32, #tpu.memory_space<vmem>>, %arg5: memref<8x512xf32, #tpu.memory_space<vmem>>) attributes {dimension_semantics = [#tpu.dimension_semantics<parallel>, #tpu.dimension_semantics<parallel>], iteration_bounds = array<i64: 2, 1>, scalar_prefetch = 0 : i64, scratch_operands = 0 : i64, tpu.core_type = #tpu.core_type<tc>, window_params = [{transform_indices = @transform_0, window_bounds = array<i64: 8, 512>}, {pipeline_mode = #tpu.pipeline_mode<synchronous>, transform_indices = @transform_1, window_bounds = array<i64: 512, 512>}, {pipeline_mode = #tpu.pipeline_mode<synchronous>, transform_indices = @transform_2, window_bounds = array<i64: 1, 512>}, {transform_indices = @transform_3, window_bounds = array<i64: 8, 512>}]} {
    %c0 = arith.constant 0 : index
    %c0_0 = arith.constant 0 : index
    %0 = vector.load %arg2[%c0, %c0_0] : memref<8x512xf32, #tpu.memory_space<vmem>>, vector<8x512xf32>
    %1 = arith.truncf %0 : vector<8x512xf32> to vector<8x512xbf16>
    %c0_1 = arith.constant 0 : index
    %c0_2 = arith.constant 0 : index
    %2 = vector.load %arg3[%c0_1, %c0_2] : memref<512x512xbf16, #tpu.memory_space<vmem>>, vector<512x512xbf16>
    %cst = arith.constant dense<0.000000e+00> : vector<8x512xf32>
    %3 = tpu.matmul %1, %2, %cst {dimension_numbers = #tpu.dot_dimension_numbers<[1], [0], [0], [1], [0, 0, 1, 1], [], []>} : vector<8x512xbf16>, vector<512x512xbf16>, vector<8x512xf32> -> vector<8x512xf32>
    %c0_3 = arith.constant 0 : index
    %c0_4 = arith.constant 0 : index
    %4 = vector.load %arg4[%c0_3, %c0_4] : memref<1x512xf32, #tpu.memory_space<vmem>>, vector<1x512xf32>
    %5 = vector.broadcast %4 : vector<1x512xf32> to vector<8x512xf32>
    %6 = arith.addf %3, %5 : vector<8x512xf32>
    %c0_5 = arith.constant 0 : index
    %c0_6 = arith.constant 0 : index
    %7 = vector.load %arg5[%c0_5, %c0_6] : memref<8x512xf32, #tpu.memory_space<vmem>>, vector<8x512xf32>
    tpu.vector_store %arg5[%c0_5, %c0_6], %6 {strides = array<i32>} : memref<8x512xf32, #tpu.memory_space<vmem>>, vector<8x512xf32>,
    return
  }
  func.func @transform_0(%arg0: i32, %arg1: i32) -> (i32, i32) {
    %c0_i32 = arith.constant 0 : i32
    %c0_i32_0 = arith.constant 0 : i32
    return %arg0, %c0_i32 : i32, i32
  }
  func.func @transform_1(%arg0: i32, %arg1: i32) -> (i32, i32) {
    %c0_i32 = arith.constant 0 : i32
    %c0_i32_0 = arith.constant 0 : i32
    return %c0_i32, %arg1 : i32, i32
  }
  func.func @transform_2(%arg0: i32, %arg1: i32) -> (i32, i32) {
    %c0_i32 = arith.constant 0 : i32
    %c0_i32_0 = arith.constant 0 : i32
    return %c0_i32, %arg1 : i32, i32
  }
  func.func @transform_3(%arg0: i32, %arg1: i32) -> (i32, i32) {
    %c0_i32 = arith.constant 0 : i32
    return %arg0, %arg1 : i32, i32
  }
}

</mosaic_0001>

<llo_original>
// kernel: tpu_custom_call.1
$region0: #{tpu_custom_call.1}
  #allocation0 [shape = 'u32[]', space=smem, size = 0x4, offset = 0x4, fixed_abs, tag = 'smem constant byte address 0x4 - core index']
  #allocation1 [shape = 'u32[144,128]{1,0:T(1,128)}', space=vmem, size = 0x12000, scoped, tag = 'internal scratch']
  %s0 = inlined_call_operand.hbm [shape: f32[16,512], index: 0, kind: input, shape index: {}]
  %s1 = inlined_call_operand.hbm [shape: bf16[512,512], index: 1, kind: input, shape index: {}]
  %s2 = inlined_call_operand.vmem [shape: f32[1,512], index: 2, kind: input, shape index: {}]
  %s3 = inlined_call_operand.hbm [shape: f32[16,512], index: 3, kind: output, shape index: {}]
  %s4 = sld [smem:[#allocation0]]
  $region53: #{tpu_custom_call.1} parent=0
    _
  %s6 = ssub.s32 1, %s4
  %s7 = scalar_select 0, %s6, %s4
  $region1: #{tpu_custom_call.1} parent=0
    #allocation2 [shape = 'u8[32768]{0}', space=vmem, size = 0x8000, scoped, tag = 'input window, operand 0']
    #allocation3 [shape = 's32[2]{0}', space=sflag, size = 0x8, scoped, tag = 'scoped memory for tpu_custom_call.1']
    #allocation4 [shape = 's32[2]{0}', space=sflag, size = 0x8, scoped, tag = 'scoped memory for tpu_custom_call.1']
    #allocation5 [shape = 'u8[524288]{0}', space=vmem, size = 0x80000, scoped, tag = 'input window, operand 1, single buffered']
    #allocation6 [shape = 's32[1]{0}', space=sflag, size = 0x4, scoped, tag = 'scoped memory for tpu_custom_call.1']
    #allocation7 [shape = 'u8[32768]{0}', space=vmem, size = 0x8000, scoped, tag = 'output window, operand 0']
    %8 = vsyncpa [#allocation3], 0
    %s9 = scalar_lea.sflag [#allocation3], 1
    %10 = vsyncpa %s9, 0
    %11 = vsyncpa [#allocation6], 0
    %12 = vsyncpa [#allocation4], 0
    %s13 = scalar_lea.sflag [#allocation4], 1
    %14 = vsyncpa %s13, 0
    loop: start=0, step=1, limit=4
    $region2: #{tpu_custom_call.1} parent=1 // loop_pre_header
      _
    $region3: #{tpu_custom_call.1} parent=1 // loop_header
      %s16 = sphi 0, %s20
      %p17 = scmp.ge.s32.totalorder %s16, 4
      %s23 = sphi 0, %s35
      %s24 = sphi 0, %s31
      %s25 = sphi 0, %s23
      %s26 = sphi 0, %s24
      %s27 = sphi 0, %s25
      %s28 = sphi 0, %s26
      %s38 = sphi 0, %s40
      %s41 = sphi 0, %s38
      %s42 = sphi 0, %s41
      %s58 = sphi 0, %s42
      %s64 = sphi 0, %s66
      %s67 = sphi 0, %s64
      %s68 = sphi 0, %s67
      %s84 = sphi 0, %s68
      %s90 = sphi 0, %s92
      %s93 = sphi 0, %s90
      %s94 = sphi 0, %s93
      %s110 = sphi 0, %s94
      %s118 = sphi 0, %s120
      %s121 = sphi 0, %s118
      %s122 = sphi 0, %s121
      %s138 = sphi 0, %s122
    $region4: #{tpu_custom_call.1} parent=1 // loop_header_branch
      %19 = sbr.rel (%p17) target = $region8
    $region5: #{tpu_custom_call.1} parent=1 // loop_body
      %s21 = ssub.s32 %s16, 1
      %s22 = ssub.s32 %s16, 2
      %s29 = sadd.s32 1, %s24
      %p30 = scmp.ge.s32.totalorder %s29, 1
      %s31 = scalar_select %p30, 0, %s29
      %s32 = sadd.s32 1, %s23
      %s33 = scalar_select %p30, %s32, %s23
      %p34 = scmp.ge.s32.totalorder %s33, 2
      %s35 = scalar_select %p34, 0, %s33
      %s36 = ssub.s32 %s23, %s35
      %p37 = scmp.eq.s32.totalorder %s36, 0
      %s39 = sadd.s32 %s38, 1
      %s40 = scalar_select %p37, %s38, %s39
      %p43 = pneg %p37
      %p44 = scmp.eq.s32.totalorder %s16, 1
      %p45 = por %p43, %p44
      %p46 = scmp.ne.s32.totalorder %s38, %s41
      %p47 = scmp.eq.s32.totalorder %s16, 0
      %p48 = por %p46, %p47
      %p49 = scmp.ne.s32.totalorder %s38, %s41
      %p50 = scmp.eq.s32.totalorder %s21, 1
      %p51 = por %p49, %p50
      %p52 = scmp.ne.s32.totalorder %s41, %s42
      %p53 = scmp.eq.s32.totalorder %s21, 0
      %p54 = por %p52, %p53
      %p55 = scmp.ne.s32.totalorder %s41, %s42
      %p56 = scmp.eq.s32.totalorder %s22, 1
      %p57 = por %p55, %p56
      %p59 = scmp.ne.s32.totalorder %s42, %s58
      %p60 = scmp.eq.s32.totalorder %s22, 0
      %p61 = por %p59, %p60
      %s62 = ssub.s32 %s24, %s31
      %p63 = scmp.eq.s32.totalorder %s62, 0
      %s65 = sadd.s32 %s64, 1
      %s66 = scalar_select %p63, %s64, %s65
      %p69 = pneg %p63
      %p70 = scmp.eq.s32.totalorder %s16, 1
      %p71 = por %p69, %p70
      %p72 = scmp.ne.s32.totalorder %s64, %s67
      %p73 = scmp.eq.s32.totalorder %s16, 0
      %p74 = por %p72, %p73
      %p75 = scmp.ne.s32.totalorder %s64, %s67
      %p76 = scmp.eq.s32.totalorder %s21, 1
      %p77 = por %p75, %p76
      %p78 = scmp.ne.s32.totalorder %s67, %s68
      %p79 = scmp.eq.s32.totalorder %s21, 0
      %p80 = por %p78, %p79
      %p81 = scmp.ne.s32.totalorder %s67, %s68
      %p82 = scmp.eq.s32.totalorder %s22, 1
      %p83 = por %p81, %p82
      %p85 = scmp.ne.s32.totalorder %s68, %s84
      %p86 = scmp.eq.s32.totalorder %s22, 0
      %p87 = por %p85, %p86
      %s88 = ssub.s32 %s24, %s31
      %p89 = scmp.eq.s32.totalorder %s88, 0
      %s91 = sadd.s32 %s90, 1
      %s92 = scalar_select %p89, %s90, %s91
      %p95 = pneg %p89
      %p96 = scmp.eq.s32.totalorder %s16, 1
      %p97 = por %p95, %p96
      %p98 = scmp.ne.s32.totalorder %s90, %s93
      %p99 = scmp.eq.s32.totalorder %s16, 0
      %p100 = por %p98, %p99
      %p101 = scmp.ne.s32.totalorder %s90, %s93
      %p102 = scmp.eq.s32.totalorder %s21, 1
      %p103 = por %p101, %p102
      %p104 = scmp.ne.s32.totalorder %s93, %s94
      %p105 = scmp.eq.s32.totalorder %s21, 0
      %p106 = por %p104, %p105
      %p107 = scmp.ne.s32.totalorder %s93, %s94
      %p108 = scmp.eq.s32.totalorder %s22, 1
      %p109 = por %p107, %p108
      %p111 = scmp.ne.s32.totalorder %s94, %s110
      %p112 = scmp.eq.s32.totalorder %s22, 0
      %p113 = por %p111, %p112
      %s114 = ssub.s32 %s23, %s35
      %s115 = ssub.s32 %s24, %s31
      %s116 = sor.u32 %s114, %s115
      %p117 = scmp.eq.s32.totalorder %s116, 0
      %s119 = sadd.s32 %s118, 1
      %s120 = scalar_select %p117, %s118, %s119
      %p123 = pneg %p117
      %p124 = scmp.eq.s32.totalorder %s16, 1
      %p125 = por %p123, %p124
      %p126 = scmp.ne.s32.totalorder %s118, %s121
      %p127 = scmp.eq.s32.totalorder %s16, 0
      %p128 = por %p126, %p127
      %p129 = scmp.ne.s32.totalorder %s118, %s121
      %p130 = scmp.eq.s32.totalorder %s21, 1
      %p131 = por %p129, %p130
      %p132 = scmp.ne.s32.totalorder %s121, %s122
      %p133 = scmp.eq.s32.totalorder %s21, 0
      %p134 = por %p132, %p133
      %p135 = scmp.ne.s32.totalorder %s121, %s122
      %p136 = scmp.eq.s32.totalorder %s22, 1
      %p137 = por %p135, %p136
      %p139 = scmp.ne.s32.totalorder %s122, %s138
      %p140 = scmp.eq.s32.totalorder %s22, 0
      %p141 = por %p139, %p140
      %p142 = scmp.le.s32.totalorder 1, %s16
      %p143 = scmp.lt.s32.totalorder %s16, 3
      %p144 = pnand %p142, %p143
      %p145 = pneg %p144
      // Predicated region
      $region9: #{tpu_custom_call.1} parent=5 // pred_check
        _
      $region10: #{tpu_custom_call.1} parent=5 // pred_check_branch
        %147 = sbr.rel (%p144) target = $region12
      $region11: #{tpu_custom_call.1} parent=5 // pred_region
        %s148 = ssub.s32 %s16, 1
        // Predicated region
        $region13: #{tpu_custom_call.1} parent=11 // pred_check
          %p149 = pneg %p80
        $region14: #{tpu_custom_call.1} parent=11 // pred_check_branch
          %151 = sbr.rel (%p149) target = $region16
        $region15: #{tpu_custom_call.1} parent=11 // pred_region
          %s152 = smul.u32 4, %s26
          %s154 = ssub.s32 16384, 16384
          %155 = vsyncadd [#allocation6], %s154
          %s156 = smul.addr %s152, 64
          %s157 = scalar_lea.hbm %s1, %s156
          %s158 = sshll.u32 [#allocation5], 4
          %s159 = int_to_ptr.vmem [resolvable:$true] %s158
          %164 = dma.hbm_to_vmem [thread:$0]  %s157, 16384, %s159, [#allocation6], 256, 256, 16
        $region16: #{tpu_custom_call.1} parent=11 // pred_fallthru
          _
        // Predicated region
        $region17: #{tpu_custom_call.1} parent=11 // pred_check
          %p165 = pneg %p106
        $region18: #{tpu_custom_call.1} parent=11 // pred_check_branch
          %167 = sbr.rel (%p165) target = $region20
        $region19: #{tpu_custom_call.1} parent=11 // pred_region
          %s168 = smul.u32 4, %s26
          %p169 = scmp.lt.s32.totalorder %s168, 3
          %s170 = scalar_select %p169, %s168, 3
          %s171 = scalar_lea.vmem %s2, %s170
          %s172 = smul.u32 4, %s26
        $region20: #{tpu_custom_call.1} parent=11 // pred_fallthru
          _
      $region12: #{tpu_custom_call.1} parent=5 // pred_fallthru
        _
      %p173 = scmp.lt.s32.totalorder %s16, 2
      // Predicated region
      $region21: #{tpu_custom_call.1} parent=5 // pred_check
        %p174 = pneg %p173
      $region22: #{tpu_custom_call.1} parent=5 // pred_check_branch
        %176 = sbr.rel (%p174) target = $region24
      $region23: #{tpu_custom_call.1} parent=5 // pred_region
        // Predicated region
        $region25: #{tpu_custom_call.1} parent=23 // pred_check
          %p177 = pneg %p48
        $region26: #{tpu_custom_call.1} parent=23 // pred_check_branch
          %179 = sbr.rel (%p177) target = $region28
        $region27: #{tpu_custom_call.1} parent=23 // pred_region
          %s180 = sand.u32 %s38, 1
          %s181 = scalar_lea.sflag [#allocation3], %s180
          %s182 = sand.u32 %s38, 1
          %s183 = smul.addr %s182, 32
          %s184 = scalar_lea.vmem [#allocation2], %s183
          %s186 = ssub.s32 512, 512
          %187 = vsyncadd %s181, %s186
          %s188 = smul.addr %s23, 4
          %s189 = smul.addr %s188, 128
          %s190 = scalar_lea.hbm %s0, %s189
          %s192 = sshll.u32 %s184, 4
          %s193 = int_to_ptr.vmem [resolvable:$true] %s192
          %195 = dma.hbm_to_vmem [thread:$0]  %s190, 512, %s193, %s181
        $region28: #{tpu_custom_call.1} parent=23 // pred_fallthru
          _
      $region24: #{tpu_custom_call.1} parent=5 // pred_fallthru
        _
      %p196 = scmp.le.s32.totalorder 1, %s16
      %p197 = scmp.lt.s32.totalorder %s16, 3
      %p198 = pnand %p196, %p197
      %p199 = pneg %p198
      // Predicated region
      $region29: #{tpu_custom_call.1} parent=5 // pred_check
        _
      $region30: #{tpu_custom_call.1} parent=5 // pred_check_branch
        %201 = sbr.rel (%p198) target = $region32
      $region31: #{tpu_custom_call.1} parent=5 // pred_region
        %s202 = ssub.s32 %s16, 1
        %s203 = sand.u32 %s41, 1
        %s204 = scalar_lea.sflag [#allocation3], %s203
        %s205 = sand.u32 %s41, 1
        %s206 = smul.addr %s205, 32
        %s207 = scalar_lea.vmem [#allocation2], %s206
        // Predicated region
        $region33: #{tpu_custom_call.1} parent=31 // pred_check
          %p208 = pneg %p54
        $region34: #{tpu_custom_call.1} parent=31 // pred_check_branch
          %210 = sbr.rel (%p208) target = $region36
        $region35: #{tpu_custom_call.1} parent=31 // pred_region
          %211 = dma.done %s204, 512
        $region36: #{tpu_custom_call.1} parent=31 // pred_fallthru
          _
        // Predicated region
        $region37: #{tpu_custom_call.1} parent=31 // pred_check
          %p212 = pneg %p80
        $region38: #{tpu_custom_call.1} parent=31 // pred_check_branch
          %214 = sbr.rel (%p212) target = $region40
        $region39: #{tpu_custom_call.1} parent=31 // pred_region
          %215 = dma.done [#allocation6], 16384
        $region40: #{tpu_custom_call.1} parent=31 // pred_fallthru
          _
        %s216 = sand.u32 %s41, 1
        %s217 = scalar_lea.sflag [#allocation3], %s216
        %s218 = sand.u32 %s41, 1
        %s219 = smul.addr %s218, 32
        %s220 = scalar_lea.vmem [#allocation2], %s219
        %p221 = pneg %p54
        %p222 = pneg %p51
        %p223 = pneg %p80
        %p224 = pneg %p77
        %s225 = smul.u32 4, %s26
        %p226 = scmp.lt.s32.totalorder %s225, 3
        %s227 = scalar_select %p226, %s225, 3
        %s228 = scalar_lea.vmem %s2, %s227
        %p229 = pneg %p106
        %p230 = pneg %p103
        %p231 = pneg %p134
        %p232 = pneg %p131
        %s233 = sand.u32 %s121, 1
        %s234 = scalar_lea.sflag [#allocation4], %s233
        %s235 = sand.u32 %s121, 1
        %s236 = smul.addr %s235, 32
        %s237 = scalar_lea.vmem [#allocation7], %s236
        %s238 = smul.u32 4, %s26
        %s239 = smul.u32 4, %s26
        %p240 = scmp.lt.s32.totalorder %s239, 3
        %s241 = scalar_select %p240, %s239, 3
        %s242 = scalar_lea.vmem %s2, %s241
        %s243 = smul.u32 4, %s26
        %s244 = smul.u32 4, %s26
        %v245 = vld [vmem:[%s207] sm:$0xff]
        %v246 = vld [vmem:[%s207 + $0x8] sm:$0xff]
        %v247 = vld [vmem:[%s207 + $0x10] sm:$0xff]
        %v248 = vld [vmem:[%s207 + $0x18] sm:$0xff]
        %v249 = vpack.c.bf16 %v245, %v245
        %v250 = vpack.c.bf16 %v246, %v246
        %v251 = vpack.c.bf16 %v247, %v247
        %v252 = vpack.c.bf16 %v248, %v248
        %v253 = vld [vmem:[#allocation5] sm:$0xff]
        %v254 = vld [vmem:[#allocation5 + $0x8] sm:$0xff]
        %v255 = vld [vmem:[#allocation5 + $0x10] sm:$0xff]
        %v256 = vld [vmem:[#allocation5 + $0x18] sm:$0xff]
        %v257 = vld [vmem:[#allocation5 + $0x20] sm:$0xff]
        %v258 = vld [vmem:[#allocation5 + $0x28] sm:$0xff]
        %v259 = vld [vmem:[#allocation5 + $0x30] sm:$0xff]
        %v260 = vld [vmem:[#allocation5 + $0x38] sm:$0xff]
        %v261 = vld [vmem:[#allocation5 + $0x40] sm:$0xff]
        %v262 = vld [vmem:[#allocation5 + $0x48] sm:$0xff]
        %v263 = vld [vmem:[#allocation5 + $0x50] sm:$0xff]
        %v264 = vld [vmem:[#allocation5 + $0x58] sm:$0xff]
        %v265 = vld [vmem:[#allocation5 + $0x60] sm:$0xff]
        %v266 = vld [vmem:[#allocation5 + $0x68] sm:$0xff]
        %v267 = vld [vmem:[#allocation5 + $0x70] sm:$0xff]
        %v268 = vld [vmem:[#allocation5 + $0x78] sm:$0xff]
        %v269 = vld [vmem:[#allocation5 + $0x80] sm:$0xff]
        %v270 = vld [vmem:[#allocation5 + $0x88] sm:$0xff]
        %v271 = vld [vmem:[#allocation5 + $0x90] sm:$0xff]
        %v272 = vld [vmem:[#allocation5 + $0x98] sm:$0xff]
        %v273 = vld [vmem:[#allocation5 + $0xa0] sm:$0xff]
        %v274 = vld [vmem:[#allocation5 + $0xa8] sm:$0xff]
        %v275 = vld [vmem:[#allocation5 + $0xb0] sm:$0xff]
        %v276 = vld [vmem:[#allocation5 + $0xb8] sm:$0xff]
        %v277 = vld [vmem:[#allocation5 + $0xc0] sm:$0xff]
        %v278 = vld [vmem:[#allocation5 + $0xc8] sm:$0xff]
        %v279 = vld [vmem:[#allocation5 + $0xd0] sm:$0xff]
        %v280 = vld [vmem:[#allocation5 + $0xd8] sm:$0xff]
        %v281 = vld [vmem:[#allocation5 + $0xe0] sm:$0xff]
        %v282 = vld [vmem:[#allocation5 + $0xe8] sm:$0xff]
        %v283 = vld [vmem:[#allocation5 + $0xf0] sm:$0xff]
        %v284 = vld [vmem:[#allocation5 + $0xf8] sm:$0xff]
        %v285 = vld [vmem:[#allocation5 + $0x100] sm:$0xff]
        %v286 = vld [vmem:[#allocation5 + $0x108] sm:$0xff]
        %v287 = vld [vmem:[#allocation5 + $0x110] sm:$0xff]
        %v288 = vld [vmem:[#allocation5 + $0x118] sm:$0xff]
        %v289 = vld [vmem:[#allocation5 + $0x120] sm:$0xff]
        %v290 = vld [vmem:[#allocation5 + $0x128] sm:$0xff]
        %v291 = vld [vmem:[#allocation5 + $0x130] sm:$0xff]
        %v292 = vld [vmem:[#allocation5 + $0x138] sm:$0xff]
        %v293 = vld [vmem:[#allocation5 + $0x140] sm:$0xff]
        %v294 = vld [vmem:[#allocation5 + $0x148] sm:$0xff]
        %v295 = vld [vmem:[#allocation5 + $0x150] sm:$0xff]
        %v296 = vld [vmem:[#allocation5 + $0x158] sm:$0xff]
        %v297 = vld [vmem:[#allocation5 + $0x160] sm:$0xff]
        %v298 = vld [vmem:[#allocation5 + $0x168] sm:$0xff]
        %v299 = vld [vmem:[#allocation5 + $0x170] sm:$0xff]
        %v300 = vld [vmem:[#allocation5 + $0x178] sm:$0xff]
        %v301 = vld [vmem:[#allocation5 + $0x180] sm:$0xff]
        %v302 = vld [vmem:[#allocation5 + $0x188] sm:$0xff]
        %v303 = vld [vmem:[#allocation5 + $0x190] sm:$0xff]
        %v304 = vld [vmem:[#allocation5 + $0x198] sm:$0xff]
        %v305 = vld [vmem:[#allocation5 + $0x1a0] sm:$0xff]
        %v306 = vld [vmem:[#allocation5 + $0x1a8] sm:$0xff]
        %v307 = vld [vmem:[#allocation5 + $0x1b0] sm:$0xff]
        %v308 = vld [vmem:[#allocation5 + $0x1b8] sm:$0xff]
        %v309 = vld [vmem:[#allocation5 + $0x1c0] sm:$0xff]
        %v310 = vld [vmem:[#allocation5 + $0x1c8] sm:$0xff]
        %v311 = vld [vmem:[#allocation5 + $0x1d0] sm:$0xff]
        %v312 = vld [vmem:[#allocation5 + $0x1d8] sm:$0xff]
        %v313 = vld [vmem:[#allocation5 + $0x1e0] sm:$0xff]
        %v314 = vld [vmem:[#allocation5 + $0x1e8] sm:$0xff]
        %v315 = vld [vmem:[#allocation5 + $0x1f0] sm:$0xff]
        %v316 = vld [vmem:[#allocation5 + $0x1f8] sm:$0xff]
        %v317 = vld [vmem:[#allocation5 + $0x200] sm:$0xff]
        %v318 = vld [vmem:[#allocation5 + $0x208] sm:$0xff]
        %v319 = vld [vmem:[#allocation5 + $0x210] sm:$0xff]
        %v320 = vld [vmem:[#allocation5 + $0x218] sm:$0xff]
        %v321 = vld [vmem:[#allocation5 + $0x220] sm:$0xff]
        %v322 = vld [vmem:[#allocation5 + $0x228] sm:$0xff]
        %v323 = vld [vmem:[#allocation5 + $0x230] sm:$0xff]
        %v324 = vld [vmem:[#allocation5 + $0x238] sm:$0xff]
        %v325 = vld [vmem:[#allocation5 + $0x240] sm:$0xff]
        %v326 = vld [vmem:[#allocation5 + $0x248] sm:$0xff]
        %v327 = vld [vmem:[#allocation5 + $0x250] sm:$0xff]
        %v328 = vld [vmem:[#allocation5 + $0x258] sm:$0xff]
        %v329 = vld [vmem:[#allocation5 + $0x260] sm:$0xff]
        %v330 = vld [vmem:[#allocation5 + $0x268] sm:$0xff]
        %v331 = vld [vmem:[#allocation5 + $0x270] sm:$0xff]
        %v332 = vld [vmem:[#allocation5 + $0x278] sm:$0xff]
        %v333 = vld [vmem:[#allocation5 + $0x280] sm:$0xff]
        %v334 = vld [vmem:[#allocation5 + $0x288] sm:$0xff]
        %v335 = vld [vmem:[#allocation5 + $0x290] sm:$0xff]
        %v336 = vld [vmem:[#allocation5 + $0x298] sm:$0xff]
        %v337 = vld [vmem:[#allocation5 + $0x2a0] sm:$0xff]
        %v338 = vld [vmem:[#allocation5 + $0x2a8] sm:$0xff]
        %v339 = vld [vmem:[#allocation5 + $0x2b0] sm:$0xff]
        %v340 = vld [vmem:[#allocation5 + $0x2b8] sm:$0xff]
        %v341 = vld [vmem:[#allocation5 + $0x2c0] sm:$0xff]
        %v342 = vld [vmem:[#allocation5 + $0x2c8] sm:$0xff]
        %v343 = vld [vmem:[#allocation5 + $0x2d0] sm:$0xff]
        %v344 = vld [vmem:[#allocation5 + $0x2d8] sm:$0xff]
        %v345 = vld [vmem:[#allocation5 + $0x2e0] sm:$0xff]
        %v346 = vld [vmem:[#allocation5 + $0x2e8] sm:$0xff]
        %v347 = vld [vmem:[#allocation5 + $0x2f0] sm:$0xff]
        %v348 = vld [vmem:[#allocation5 + $0x2f8] sm:$0xff]
        %v349 = vld [vmem:[#allocation5 + $0x300] sm:$0xff]
        %v350 = vld [vmem:[#allocation5 + $0x308] sm:$0xff]
        %v351 = vld [vmem:[#allocation5 + $0x310] sm:$0xff]
        %v352 = vld [vmem:[#allocation5 + $0x318] sm:$0xff]
        %v353 = vld [vmem:[#allocation5 + $0x320] sm:$0xff]
        %v354 = vld [vmem:[#allocation5 + $0x328] sm:$0xff]
        %v355 = vld [vmem:[#allocation5 + $0x330] sm:$0xff]
        %v356 = vld [vmem:[#allocation5 + $0x338] sm:$0xff]
        %v357 = vld [vmem:[#allocation5 + $0x340] sm:$0xff]
        %v358 = vld [vmem:[#allocation5 + $0x348] sm:$0xff]
        %v359 = vld [vmem:[#allocation5 + $0x350] sm:$0xff]
        %v360 = vld [vmem:[#allocation5 + $0x358] sm:$0xff]
        %v361 = vld [vmem:[#allocation5 + $0x360] sm:$0xff]
        %v362 = vld [vmem:[#allocation5 + $0x368] sm:$0xff]
        %v363 = vld [vmem:[#allocation5 + $0x370] sm:$0xff]
        %v364 = vld [vmem:[#allocation5 + $0x378] sm:$0xff]
        %v365 = vld [vmem:[#allocation5 + $0x380] sm:$0xff]
        %v366 = vld [vmem:[#allocation5 + $0x388] sm:$0xff]
        %v367 = vld [vmem:[#allocation5 + $0x390] sm:$0xff]
        %v368 = vld [vmem:[#allocation5 + $0x398] sm:$0xff]
        %v369 = vld [vmem:[#allocation5 + $0x3a0] sm:$0xff]
        %v370 = vld [vmem:[#allocation5 + $0x3a8] sm:$0xff]
        %v371 = vld [vmem:[#allocation5 + $0x3b0] sm:$0xff]
        %v372 = vld [vmem:[#allocation5 + $0x3b8] sm:$0xff]
        %v373 = vld [vmem:[#allocation5 + $0x3c0] sm:$0xff]
        %v374 = vld [vmem:[#allocation5 + $0x3c8] sm:$0xff]
        %v375 = vld [vmem:[#allocation5 + $0x3d0] sm:$0xff]
        %v376 = vld [vmem:[#allocation5 + $0x3d8] sm:$0xff]
        %v377 = vld [vmem:[#allocation5 + $0x3e0] sm:$0xff]
        %v378 = vld [vmem:[#allocation5 + $0x3e8] sm:$0xff]
        %v379 = vld [vmem:[#allocation5 + $0x3f0] sm:$0xff]
        %v380 = vld [vmem:[#allocation5 + $0x3f8] sm:$0xff]
        %v381 = vld [vmem:[%s242] sm:$0xf]
        %v383 = vlaneseq
        %v384 = vshrl.u32 %v383, 7
        %v385 = vsub.s32 0, %v384
        %v386 = vrot.slane %v381, %v385
        %v387 = vlaneseq
        %v388 = vshrl.u32 %v387, 7
        %v389 = vsub.s32 1, %v388
        %v390 = vrot.slane %v381, %v389
        %v391 = vlaneseq
        %v392 = vshrl.u32 %v391, 7
        %v393 = vsub.s32 2, %v392
        %v394 = vrot.slane %v381, %v393
        %v395 = vlaneseq
        %v396 = vshrl.u32 %v395, 7
        %v397 = vsub.s32 3, %v396
        %v398 = vrot.slane %v381, %v397
        %v531 = vunpack.c.l.b16 %v253
        %v532 = vunpack.c.h.b16 %v253
        %v533 = vunpack.c.l.b16 %v254
        %v534 = vunpack.c.h.b16 %v254
        %v535 = vunpack.c.l.b16 %v255
        %v536 = vunpack.c.h.b16 %v255
        %v537 = vunpack.c.l.b16 %v256
        %v538 = vunpack.c.h.b16 %v256
        %v539 = vunpack.c.l.b16 %v257
        %v540 = vunpack.c.h.b16 %v257
        %v541 = vunpack.c.l.b16 %v258
        %v542 = vunpack.c.h.b16 %v258
        %v543 = vunpack.c.l.b16 %v259
        %v544 = vunpack.c.h.b16 %v259
        %v545 = vunpack.c.l.b16 %v260
        %v546 = vunpack.c.h.b16 %v260
        %v547 = vunpack.c.l.b16 %v261
        %v548 = vunpack.c.h.b16 %v261
        %v549 = vunpack.c.l.b16 %v262
        %v550 = vunpack.c.h.b16 %v262
        %v551 = vunpack.c.l.b16 %v263
        %v552 = vunpack.c.h.b16 %v263
        %v553 = vunpack.c.l.b16 %v264
        %v554 = vunpack.c.h.b16 %v264
        %v555 = vunpack.c.l.b16 %v265
        %v556 = vunpack.c.h.b16 %v265
        %v557 = vunpack.c.l.b16 %v266
        %v558 = vunpack.c.h.b16 %v266
        %v559 = vunpack.c.l.b16 %v267
        %v560 = vunpack.c.h.b16 %v267
        %v561 = vunpack.c.l.b16 %v268
        %v562 = vunpack.c.h.b16 %v268
        %v563 = vunpack.c.l.b16 %v269
        %v564 = vunpack.c.h.b16 %v269
        %v565 = vunpack.c.l.b16 %v270
        %v566 = vunpack.c.h.b16 %v270
        %v567 = vunpack.c.l.b16 %v271
        %v568 = vunpack.c.h.b16 %v271
        %v569 = vunpack.c.l.b16 %v272
        %v570 = vunpack.c.h.b16 %v272
        %v571 = vunpack.c.l.b16 %v273
        %v572 = vunpack.c.h.b16 %v273
        %v573 = vunpack.c.l.b16 %v274
        %v574 = vunpack.c.h.b16 %v274
        %v575 = vunpack.c.l.b16 %v275
        %v576 = vunpack.c.h.b16 %v275
        %v577 = vunpack.c.l.b16 %v276
        %v578 = vunpack.c.h.b16 %v276
        %v579 = vunpack.c.l.b16 %v277
        %v580 = vunpack.c.h.b16 %v277
        %v581 = vunpack.c.l.b16 %v278
        %v582 = vunpack.c.h.b16 %v278
        %v583 = vunpack.c.l.b16 %v279
        %v584 = vunpack.c.h.b16 %v279
        %v585 = vunpack.c.l.b16 %v280
        %v586 = vunpack.c.h.b16 %v280
        %v587 = vunpack.c.l.b16 %v281
        %v588 = vunpack.c.h.b16 %v281
        %v589 = vunpack.c.l.b16 %v282
        %v590 = vunpack.c.h.b16 %v282
        %v591 = vunpack.c.l.b16 %v283
        %v592 = vunpack.c.h.b16 %v283
        %v593 = vunpack.c.l.b16 %v284
        %v594 = vunpack.c.h.b16 %v284
        %v595 = vunpack.c.l.b16 %v285
        %v596 = vunpack.c.h.b16 %v285
        %v597 = vunpack.c.l.b16 %v286
        %v598 = vunpack.c.h.b16 %v286
        %v599 = vunpack.c.l.b16 %v287
        %v600 = vunpack.c.h.b16 %v287
        %v601 = vunpack.c.l.b16 %v288
        %v602 = vunpack.c.h.b16 %v288
        %v603 = vunpack.c.l.b16 %v289
        %v604 = vunpack.c.h.b16 %v289
        %v605 = vunpack.c.l.b16 %v290
        %v606 = vunpack.c.h.b16 %v290
        %v607 = vunpack.c.l.b16 %v291
        %v608 = vunpack.c.h.b16 %v291
        %v609 = vunpack.c.l.b16 %v292
        %v610 = vunpack.c.h.b16 %v292
        %v611 = vunpack.c.l.b16 %v293
        %v612 = vunpack.c.h.b16 %v293
        %v613 = vunpack.c.l.b16 %v294
        %v614 = vunpack.c.h.b16 %v294
        %v615 = vunpack.c.l.b16 %v295
        %v616 = vunpack.c.h.b16 %v295
        %v617 = vunpack.c.l.b16 %v296
        %v618 = vunpack.c.h.b16 %v296
        %v619 = vunpack.c.l.b16 %v297
        %v620 = vunpack.c.h.b16 %v297
        %v621 = vunpack.c.l.b16 %v298
        %v622 = vunpack.c.h.b16 %v298
        %v623 = vunpack.c.l.b16 %v299
        %v624 = vunpack.c.h.b16 %v299
        %v625 = vunpack.c.l.b16 %v300
        %v626 = vunpack.c.h.b16 %v300
        %v627 = vunpack.c.l.b16 %v301
        %v628 = vunpack.c.h.b16 %v301
        %v629 = vunpack.c.l.b16 %v302
        %v630 = vunpack.c.h.b16 %v302
        %v631 = vunpack.c.l.b16 %v303
        %v632 = vunpack.c.h.b16 %v303
        %v633 = vunpack.c.l.b16 %v304
        %v634 = vunpack.c.h.b16 %v304
        %v635 = vunpack.c.l.b16 %v305
        %v636 = vunpack.c.h.b16 %v305
        %v637 = vunpack.c.l.b16 %v306
        %v638 = vunpack.c.h.b16 %v306
        %v639 = vunpack.c.l.b16 %v307
        %v640 = vunpack.c.h.b16 %v307
        %v641 = vunpack.c.l.b16 %v308
        %v642 = vunpack.c.h.b16 %v308
        %v643 = vunpack.c.l.b16 %v309
        %v644 = vunpack.c.h.b16 %v309
        %v645 = vunpack.c.l.b16 %v310
        %v646 = vunpack.c.h.b16 %v310
        %v647 = vunpack.c.l.b16 %v311
        %v648 = vunpack.c.h.b16 %v311
        %v649 = vunpack.c.l.b16 %v312
        %v650 = vunpack.c.h.b16 %v312
        %v651 = vunpack.c.l.b16 %v313
        %v652 = vunpack.c.h.b16 %v313
        %v653 = vunpack.c.l.b16 %v314
        %v654 = vunpack.c.h.b16 %v314
        %v655 = vunpack.c.l.b16 %v315
        %v656 = vunpack.c.h.b16 %v315
        %v657 = vunpack.c.l.b16 %v316
        %v658 = vunpack.c.h.b16 %v316
        %v659 = vunpack.c.l.b16 %v317
        %v660 = vunpack.c.h.b16 %v317
        %v661 = vunpack.c.l.b16 %v318
        %v662 = vunpack.c.h.b16 %v318
        %v663 = vunpack.c.l.b16 %v319
        %v664 = vunpack.c.h.b16 %v319
        %v665 = vunpack.c.l.b16 %v320
        %v666 = vunpack.c.h.b16 %v320
        %v667 = vunpack.c.l.b16 %v321
        %v668 = vunpack.c.h.b16 %v321
        %v669 = vunpack.c.l.b16 %v322
        %v670 = vunpack.c.h.b16 %v322
        %v671 = vunpack.c.l.b16 %v323
        %v672 = vunpack.c.h.b16 %v323
        %v673 = vunpack.c.l.b16 %v324
        %v674 = vunpack.c.h.b16 %v324
        %v675 = vunpack.c.l.b16 %v325
        %v676 = vunpack.c.h.b16 %v325
        %v677 = vunpack.c.l.b16 %v326
        %v678 = vunpack.c.h.b16 %v326
        %v679 = vunpack.c.l.b16 %v327
        %v680 = vunpack.c.h.b16 %v327
        %v681 = vunpack.c.l.b16 %v328
        %v682 = vunpack.c.h.b16 %v328
        %v683 = vunpack.c.l.b16 %v329
        %v684 = vunpack.c.h.b16 %v329
        %v685 = vunpack.c.l.b16 %v330
        %v686 = vunpack.c.h.b16 %v330
        %v687 = vunpack.c.l.b16 %v331
        %v688 = vunpack.c.h.b16 %v331
        %v689 = vunpack.c.l.b16 %v332
        %v690 = vunpack.c.h.b16 %v332
        %v691 = vunpack.c.l.b16 %v333
        %v692 = vunpack.c.h.b16 %v333
        %v693 = vunpack.c.l.b16 %v334
        %v694 = vunpack.c.h.b16 %v334
        %v695 = vunpack.c.l.b16 %v335
        %v696 = vunpack.c.h.b16 %v335
        %v697 = vunpack.c.l.b16 %v336
        %v698 = vunpack.c.h.b16 %v336
        %v699 = vunpack.c.l.b16 %v337
        %v700 = vunpack.c.h.b16 %v337
        %v701 = vunpack.c.l.b16 %v338
        %v702 = vunpack.c.h.b16 %v338
        %v703 = vunpack.c.l.b16 %v339
        %v704 = vunpack.c.h.b16 %v339
        %v705 = vunpack.c.l.b16 %v340
        %v706 = vunpack.c.h.b16 %v340
        %v707 = vunpack.c.l.b16 %v341
        %v708 = vunpack.c.h.b16 %v341
        %v709 = vunpack.c.l.b16 %v342
        %v710 = vunpack.c.h.b16 %v342
        %v711 = vunpack.c.l.b16 %v343
        %v712 = vunpack.c.h.b16 %v343
        %v713 = vunpack.c.l.b16 %v344
        %v714 = vunpack.c.h.b16 %v344
        %v715 = vunpack.c.l.b16 %v345
        %v716 = vunpack.c.h.b16 %v345
        %v717 = vunpack.c.l.b16 %v346
        %v718 = vunpack.c.h.b16 %v346
        %v719 = vunpack.c.l.b16 %v347
        %v720 = vunpack.c.h.b16 %v347
        %v721 = vunpack.c.l.b16 %v348
        %v722 = vunpack.c.h.b16 %v348
        %v723 = vunpack.c.l.b16 %v349
        %v724 = vunpack.c.h.b16 %v349
        %v725 = vunpack.c.l.b16 %v350
        %v726 = vunpack.c.h.b16 %v350
        %v727 = vunpack.c.l.b16 %v351
        %v728 = vunpack.c.h.b16 %v351
        %v729 = vunpack.c.l.b16 %v352
        %v730 = vunpack.c.h.b16 %v352
        %v731 = vunpack.c.l.b16 %v353
        %v732 = vunpack.c.h.b16 %v353
        %v733 = vunpack.c.l.b16 %v354
        %v734 = vunpack.c.h.b16 %v354
        %v735 = vunpack.c.l.b16 %v355
        %v736 = vunpack.c.h.b16 %v355
        %v737 = vunpack.c.l.b16 %v356
        %v738 = vunpack.c.h.b16 %v356
        %v739 = vunpack.c.l.b16 %v357
        %v740 = vunpack.c.h.b16 %v357
        %v741 = vunpack.c.l.b16 %v358
        %v742 = vunpack.c.h.b16 %v358
        %v743 = vunpack.c.l.b16 %v359
        %v744 = vunpack.c.h.b16 %v359
        %v745 = vunpack.c.l.b16 %v360
        %v746 = vunpack.c.h.b16 %v360
        %v747 = vunpack.c.l.b16 %v361
        %v748 = vunpack.c.h.b16 %v361
        %v749 = vunpack.c.l.b16 %v362
        %v750 = vunpack.c.h.b16 %v362
        %v751 = vunpack.c.l.b16 %v363
        %v752 = vunpack.c.h.b16 %v363
        %v753 = vunpack.c.l.b16 %v364
        %v754 = vunpack.c.h.b16 %v364
        %v755 = vunpack.c.l.b16 %v365
        %v756 = vunpack.c.h.b16 %v365
        %v757 = vunpack.c.l.b16 %v366
        %v758 = vunpack.c.h.b16 %v366
        %v759 = vunpack.c.l.b16 %v367
        %v760 = vunpack.c.h.b16 %v367
        %v761 = vunpack.c.l.b16 %v368
        %v762 = vunpack.c.h.b16 %v368
        %v763 = vunpack.c.l.b16 %v369
        %v764 = vunpack.c.h.b16 %v369
        %v765 = vunpack.c.l.b16 %v370
        %v766 = vunpack.c.h.b16 %v370
        %v767 = vunpack.c.l.b16 %v371
        %v768 = vunpack.c.h.b16 %v371
        %v769 = vunpack.c.l.b16 %v372
        %v770 = vunpack.c.h.b16 %v372
        %v771 = vunpack.c.l.b16 %v373
        %v772 = vunpack.c.h.b16 %v373
        %v773 = vunpack.c.l.b16 %v374
        %v774 = vunpack.c.h.b16 %v374
        %v775 = vunpack.c.l.b16 %v375
        %v776 = vunpack.c.h.b16 %v375
        %v777 = vunpack.c.l.b16 %v376
        %v778 = vunpack.c.h.b16 %v376
        %v779 = vunpack.c.l.b16 %v377
        %v780 = vunpack.c.h.b16 %v377
        %v781 = vunpack.c.l.b16 %v378
        %v782 = vunpack.c.h.b16 %v378
        %v783 = vunpack.c.l.b16 %v379
        %v784 = vunpack.c.h.b16 %v379
        %v785 = vunpack.c.l.b16 %v380
        %v786 = vunpack.c.h.b16 %v380
        %v787 = vpack.c.b16 %v535, %v531
        %v788 = vpack.c.b16 %v536, %v532
        %v789 = vpack.c.b16 %v537, %v533
        %v790 = vpack.c.b16 %v538, %v534
        %v791 = vpack.c.b16 %v543, %v539
        %v792 = vpack.c.b16 %v544, %v540
        %v793 = vpack.c.b16 %v545, %v541
        %v794 = vpack.c.b16 %v546, %v542
        %v795 = vpack.c.b16 %v551, %v547
        %v796 = vpack.c.b16 %v552, %v548
        %v797 = vpack.c.b16 %v553, %v549
        %v798 = vpack.c.b16 %v554, %v550
        %v799 = vpack.c.b16 %v559, %v555
        %v800 = vpack.c.b16 %v560, %v556
        %v801 = vpack.c.b16 %v561, %v557
        %v802 = vpack.c.b16 %v562, %v558
        %v803 = vpack.c.b16 %v567, %v563
        %v804 = vpack.c.b16 %v568, %v564
        %v805 = vpack.c.b16 %v569, %v565
        %v806 = vpack.c.b16 %v570, %v566
        %v807 = vpack.c.b16 %v575, %v571
        %v808 = vpack.c.b16 %v576, %v572
        %v809 = vpack.c.b16 %v577, %v573
        %v810 = vpack.c.b16 %v578, %v574
        %v811 = vpack.c.b16 %v583, %v579
        %v812 = vpack.c.b16 %v584, %v580
        %v813 = vpack.c.b16 %v585, %v581
        %v814 = vpack.c.b16 %v586, %v582
        %v815 = vpack.c.b16 %v591, %v587
        %v816 = vpack.c.b16 %v592, %v588
        %v817 = vpack.c.b16 %v593, %v589
        %v818 = vpack.c.b16 %v594, %v590
        %v819 = vpack.c.b16 %v599, %v595
        %v820 = vpack.c.b16 %v600, %v596
        %v821 = vpack.c.b16 %v601, %v597
        %v822 = vpack.c.b16 %v602, %v598
        %v823 = vpack.c.b16 %v607, %v603
        %v824 = vpack.c.b16 %v608, %v604
        %v825 = vpack.c.b16 %v609, %v605
        %v826 = vpack.c.b16 %v610, %v606
        %v827 = vpack.c.b16 %v615, %v611
        %v828 = vpack.c.b16 %v616, %v612
        %v829 = vpack.c.b16 %v617, %v613
        %v830 = vpack.c.b16 %v618, %v614
        %v831 = vpack.c.b16 %v623, %v619
        %v832 = vpack.c.b16 %v624, %v620
        %v833 = vpack.c.b16 %v625, %v621
        %v834 = vpack.c.b16 %v626, %v622
        %v835 = vpack.c.b16 %v631, %v627
        %v836 = vpack.c.b16 %v632, %v628
        %v837 = vpack.c.b16 %v633, %v629
        %v838 = vpack.c.b16 %v634, %v630
        %v839 = vpack.c.b16 %v639, %v635
        %v840 = vpack.c.b16 %v640, %v636
        %v841 = vpack.c.b16 %v641, %v637
        %v842 = vpack.c.b16 %v642, %v638
        %v843 = vpack.c.b16 %v647, %v643
        %v844 = vpack.c.b16 %v648, %v644
        %v845 = vpack.c.b16 %v649, %v645
        %v846 = vpack.c.b16 %v650, %v646
        %v847 = vpack.c.b16 %v655, %v651
        %v848 = vpack.c.b16 %v656, %v652
        %v849 = vpack.c.b16 %v657, %v653
        %v850 = vpack.c.b16 %v658, %v654
        %v851 = vpack.c.b16 %v663, %v659
        %v852 = vpack.c.b16 %v664, %v660
        %v853 = vpack.c.b16 %v665, %v661
        %v854 = vpack.c.b16 %v666, %v662
        %v855 = vpack.c.b16 %v671, %v667
        %v856 = vpack.c.b16 %v672, %v668
        %v857 = vpack.c.b16 %v673, %v669
        %v858 = vpack.c.b16 %v674, %v670
        %v859 = vpack.c.b16 %v679, %v675
        %v860 = vpack.c.b16 %v680, %v676
        %v861 = vpack.c.b16 %v681, %v677
        %v862 = vpack.c.b16 %v682, %v678
        %v863 = vpack.c.b16 %v687, %v683
        %v864 = vpack.c.b16 %v688, %v684
        %v865 = vpack.c.b16 %v689, %v685
        %v866 = vpack.c.b16 %v690, %v686
        %v867 = vpack.c.b16 %v695, %v691
        %v868 = vpack.c.b16 %v696, %v692
        %v869 = vpack.c.b16 %v697, %v693
        %v870 = vpack.c.b16 %v698, %v694
        %v871 = vpack.c.b16 %v703, %v699
        %v872 = vpack.c.b16 %v704, %v700
        %v873 = vpack.c.b16 %v705, %v701
        %v874 = vpack.c.b16 %v706, %v702
        %v875 = vpack.c.b16 %v711, %v707
        %v876 = vpack.c.b16 %v712, %v708
        %v877 = vpack.c.b16 %v713, %v709
        %v878 = vpack.c.b16 %v714, %v710
        %v879 = vpack.c.b16 %v719, %v715
        %v880 = vpack.c.b16 %v720, %v716
        %v881 = vpack.c.b16 %v721, %v717
        %v882 = vpack.c.b16 %v722, %v718
        %v883 = vpack.c.b16 %v727, %v723
        %v884 = vpack.c.b16 %v728, %v724
        %v885 = vpack.c.b16 %v729, %v725
        %v886 = vpack.c.b16 %v730, %v726
        %v887 = vpack.c.b16 %v735, %v731
        %v888 = vpack.c.b16 %v736, %v732
        %v889 = vpack.c.b16 %v737, %v733
        %v890 = vpack.c.b16 %v738, %v734
        %v891 = vpack.c.b16 %v743, %v739
        %v892 = vpack.c.b16 %v744, %v740
        %v893 = vpack.c.b16 %v745, %v741
        %v894 = vpack.c.b16 %v746, %v742
        %v895 = vpack.c.b16 %v751, %v747
        %v896 = vpack.c.b16 %v752, %v748
        %v897 = vpack.c.b16 %v753, %v749
        %v898 = vpack.c.b16 %v754, %v750
        %v899 = vpack.c.b16 %v759, %v755
        %v900 = vpack.c.b16 %v760, %v756
        %v901 = vpack.c.b16 %v761, %v757
        %v902 = vpack.c.b16 %v762, %v758
        %v903 = vpack.c.b16 %v767, %v763
        %v904 = vpack.c.b16 %v768, %v764
        %v905 = vpack.c.b16 %v769, %v765
        %v906 = vpack.c.b16 %v770, %v766
        %v907 = vpack.c.b16 %v775, %v771
        %v908 = vpack.c.b16 %v776, %v772
        %v909 = vpack.c.b16 %v777, %v773
        %v910 = vpack.c.b16 %v778, %v774
        %v911 = vpack.c.b16 %v783, %v779
        %v912 = vpack.c.b16 %v784, %v780
        %v913 = vpack.c.b16 %v785, %v781
        %v914 = vpack.c.b16 %v786, %v782
        %1043 = vmatprep.subr.bf16.mxu0 %v788
        %1044 = vmatpush1.bf16.msra.mxu0 %v787
        %1045 = vmatprep.subr.bf16.mxu0 %v792
        %1046 = vmatpush1.bf16.msra.mxu0 %v791
        %1047 = vmatprep.subr.bf16.mxu0 %v796
        %1048 = vmatpush1.bf16.msra.mxu0 %v795
        %1049 = vmatprep.subr.bf16.mxu0 %v800
        %1050 = vmatpush1.bf16.msra.mxu0 %v799
        %1051 = vmatprep.subr.bf16.mxu0 %v804
        %1052 = vmatpush1.bf16.msra.mxu0 %v803
        %1053 = vmatprep.subr.bf16.mxu0 %v808
        %1054 = vmatpush1.bf16.msra.mxu0 %v807
        %1055 = vmatprep.subr.bf16.mxu0 %v812
        %1056 = vmatpush1.bf16.msra.mxu0 %v811
        %1057 = vmatprep.subr.bf16.mxu0 %v816
        %1058 = vmatpush1.bf16.msra.mxu0 %v815
        %1059 = vmatprep.subr.bf16.mxu0 %v820
        %1060 = vmatpush1.bf16.msra.mxu0 %v819
        %1061 = vmatprep.subr.bf16.mxu0 %v824
        %1062 = vmatpush1.bf16.msra.mxu0 %v823
        %1063 = vmatprep.subr.bf16.mxu0 %v828
        %1064 = vmatpush1.bf16.msra.mxu0 %v827
        %1065 = vmatprep.subr.bf16.mxu0 %v832
        %1066 = vmatpush1.bf16.msra.mxu0 %v831
        %1067 = vmatprep.subr.bf16.mxu0 %v836
        %1068 = vmatpush1.bf16.msra.mxu0 %v835
        %1069 = vmatprep.subr.bf16.mxu0 %v840
        %1070 = vmatpush1.bf16.msra.mxu0 %v839
        %1071 = vmatprep.subr.bf16.mxu0 %v844
        %1072 = vmatpush1.bf16.msra.mxu0 %v843
        %1073 = vmatprep.subr.bf16.mxu0 %v848
        %1074 = vmatpush1.bf16.msra.mxu0 %v847
        %1075 = vmatprep.mubr.bf16.mxu0 %v250
        %1076 = vmatmul.mubr.bf16.gmra.mrb[0].mxu0 %v249
        %v1077 = vpop.f32.mrb[0].mxu0
        %v1078 = vadd.f32 %v386, %v1077
        %v1079 = vpop.f32.mrb[0].mxu0
        %v1080 = vadd.f32 %v390, %v1079
        %v1081 = vpop.f32.mrb[0].mxu0
        %v1082 = vpop.f32.mrb[0].mxu0
        %1083 = vdwg.mxu0
        %1084 = vmatprep.subr.bf16.mxu0 %v852
        %1085 = vmatpush1.bf16.msra.mxu0 %v851
        %1086 = vmatprep.subr.bf16.mxu0 %v856
        %1087 = vmatpush1.bf16.msra.mxu0 %v855
        %1088 = vmatprep.subr.bf16.mxu0 %v860
        %1089 = vmatpush1.bf16.msra.mxu0 %v859
        %1090 = vmatprep.subr.bf16.mxu0 %v864
        %1091 = vmatpush1.bf16.msra.mxu0 %v863
        %1092 = vmatprep.subr.bf16.mxu0 %v868
        %1093 = vmatpush1.bf16.msra.mxu0 %v867
        %1094 = vmatprep.subr.bf16.mxu0 %v872
        %1095 = vmatpush1.bf16.msra.mxu0 %v871
        %1096 = vmatprep.subr.bf16.mxu0 %v876
        %1097 = vmatpush1.bf16.msra.mxu0 %v875
        %1098 = vmatprep.subr.bf16.mxu0 %v880
        %1099 = vmatpush1.bf16.msra.mxu0 %v879
        %1100 = vmatprep.subr.bf16.mxu0 %v884
        %1101 = vmatpush1.bf16.msra.mxu0 %v883
        %1102 = vmatprep.subr.bf16.mxu0 %v888
        %1103 = vmatpush1.bf16.msra.mxu0 %v887
        %1104 = vmatprep.subr.bf16.mxu0 %v892
        %1105 = vmatpush1.bf16.msra.mxu0 %v891
        %1106 = vmatprep.subr.bf16.mxu0 %v896
        %1107 = vmatpush1.bf16.msra.mxu0 %v895
        %1108 = vmatprep.subr.bf16.mxu0 %v900
        %1109 = vmatpush1.bf16.msra.mxu0 %v899
        %1110 = vmatprep.subr.bf16.mxu0 %v904
        %1111 = vmatpush1.bf16.msra.mxu0 %v903
        %1112 = vmatprep.subr.bf16.mxu0 %v908
        %1113 = vmatpush1.bf16.msra.mxu0 %v907
        %1114 = vmatprep.subr.bf16.mxu0 %v912
        %1115 = vmatpush1.bf16.msra.mxu0 %v911
        %1116 = vmatprep.mubr.bf16.mxu0 %v252
        %1117 = vmatmul.mubr.bf16.gmra.mrb[0].mxu0 %v251
        %v1118 = vpop.f32.mrb[0].mxu0
        %v1119 = vadd.f32 %v1078, %v1118
        %v1120 = vpop.f32.mrb[0].mxu0
        %v1121 = vadd.f32 %v1080, %v1120
        %v1122 = vpop.f32.mrb[0].mxu0
        %v1123 = vpop.f32.mrb[0].mxu0
        %1124 = vdwg.mxu0
        %1125 = vmatprep.subr.bf16.mxu0 %v790
        %1126 = vmatpush1.bf16.msra.mxu0 %v789
        %1127 = vmatprep.subr.bf16.mxu0 %v794
        %1128 = vmatpush1.bf16.msra.mxu0 %v793
        %1129 = vmatprep.subr.bf16.mxu0 %v798
        %1130 = vmatpush1.bf16.msra.mxu0 %v797
        %1131 = vmatprep.subr.bf16.mxu0 %v802
        %1132 = vmatpush1.bf16.msra.mxu0 %v801
        %1133 = vmatprep.subr.bf16.mxu0 %v806
        %1134 = vmatpush1.bf16.msra.mxu0 %v805
        %1135 = vmatprep.subr.bf16.mxu0 %v810
        %1136 = vmatpush1.bf16.msra.mxu0 %v809
        %1137 = vmatprep.subr.bf16.mxu0 %v814
        %1138 = vmatpush1.bf16.msra.mxu0 %v813
        %1139 = vmatprep.subr.bf16.mxu0 %v818
        %1140 = vmatpush1.bf16.msra.mxu0 %v817
        %1141 = vmatprep.subr.bf16.mxu0 %v822
        %1142 = vmatpush1.bf16.msra.mxu0 %v821
        %1143 = vmatprep.subr.bf16.mxu0 %v826
        %1144 = vmatpush1.bf16.msra.mxu0 %v825
        %1145 = vmatprep.subr.bf16.mxu0 %v830
        %1146 = vmatpush1.bf16.msra.mxu0 %v829
        %1147 = vmatprep.subr.bf16.mxu0 %v834
        %1148 = vmatpush1.bf16.msra.mxu0 %v833
        %1149 = vmatprep.subr.bf16.mxu0 %v838
        %1150 = vmatpush1.bf16.msra.mxu0 %v837
        %1151 = vmatprep.subr.bf16.mxu0 %v842
        %1152 = vmatpush1.bf16.msra.mxu0 %v841
        %1153 = vmatprep.subr.bf16.mxu0 %v846
        %1154 = vmatpush1.bf16.msra.mxu0 %v845
        %1155 = vmatprep.subr.bf16.mxu0 %v850
        %1156 = vmatpush1.bf16.msra.mxu0 %v849
        %1157 = vmatprep.mubr.bf16.mxu0 %v250
        %1158 = vmatmul.mubr.bf16.gmra.mrb[0].mxu0 %v249
        %v1159 = vpop.f32.mrb[0].mxu0
        %v1160 = vadd.f32 %v394, %v1159
        %v1161 = vpop.f32.mrb[0].mxu0
        %v1162 = vadd.f32 %v398, %v1161
        %v1163 = vpop.f32.mrb[0].mxu0
        %v1164 = vpop.f32.mrb[0].mxu0
        %1165 = vdwg.mxu0
        %1166 = vmatprep.subr.bf16.mxu0 %v854
        %1167 = vmatpush1.bf16.msra.mxu0 %v853
        %1168 = vmatprep.subr.bf16.mxu0 %v858
        %1169 = vmatpush1.bf16.msra.mxu0 %v857
        %1170 = vmatprep.subr.bf16.mxu0 %v862
        %1171 = vmatpush1.bf16.msra.mxu0 %v861
        %1172 = vmatprep.subr.bf16.mxu0 %v866
        %1173 = vmatpush1.bf16.msra.mxu0 %v865
        %1174 = vmatprep.subr.bf16.mxu0 %v870
        %1175 = vmatpush1.bf16.msra.mxu0 %v869
        %1176 = vmatprep.subr.bf16.mxu0 %v874
        %1177 = vmatpush1.bf16.msra.mxu0 %v873
        %1178 = vmatprep.subr.bf16.mxu0 %v878
        %1179 = vmatpush1.bf16.msra.mxu0 %v877
        %1180 = vmatprep.subr.bf16.mxu0 %v882
        %1181 = vmatpush1.bf16.msra.mxu0 %v881
        %1182 = vmatprep.subr.bf16.mxu0 %v886
        %1183 = vmatpush1.bf16.msra.mxu0 %v885
        %1184 = vmatprep.subr.bf16.mxu0 %v890
        %1185 = vmatpush1.bf16.msra.mxu0 %v889
        %1186 = vmatprep.subr.bf16.mxu0 %v894
        %1187 = vmatpush1.bf16.msra.mxu0 %v893
        %1188 = vmatprep.subr.bf16.mxu0 %v898
        %1189 = vmatpush1.bf16.msra.mxu0 %v897
        %1190 = vmatprep.subr.bf16.mxu0 %v902
        %1191 = vmatpush1.bf16.msra.mxu0 %v901
        %1192 = vmatprep.subr.bf16.mxu0 %v906
        %1193 = vmatpush1.bf16.msra.mxu0 %v905
        %1194 = vmatprep.subr.bf16.mxu0 %v910
        %1195 = vmatpush1.bf16.msra.mxu0 %v909
        %1196 = vmatprep.subr.bf16.mxu0 %v914
        %1197 = vmatpush1.bf16.msra.mxu0 %v913
        %1198 = vmatprep.mubr.bf16.mxu0 %v252
        %1199 = vmatmul.mubr.bf16.gmra.mrb[0].mxu0 %v251
        %v1200 = vpop.f32.mrb[0].mxu0
        %v1201 = vadd.f32 %v1160, %v1200
        %v1202 = vpop.f32.mrb[0].mxu0
        %v1203 = vadd.f32 %v1162, %v1202
        %v1204 = vpop.f32.mrb[0].mxu0
        %v1205 = vpop.f32.mrb[0].mxu0
        %1206 = vdwg.mxu0
        %1207 = vst [vmem:[%s237] sm:$0xff] %v1119
        %1208 = vst [vmem:[%s237 + $0x8] sm:$0xff] %v1121
        %1209 = vst [vmem:[%s237 + $0x10] sm:$0xff] %v1201
        %1210 = vst [vmem:[%s237 + $0x18] sm:$0xff] %v1203
        %s1211 = sand.u32 %s121, 1
        %s1212 = scalar_lea.sflag [#allocation4], %s1211
        %s1213 = sand.u32 %s121, 1
        %s1214 = smul.addr %s1213, 32
        %s1215 = scalar_lea.vmem [#allocation7], %s1214
        // Predicated region
        $region41: #{tpu_custom_call.1} parent=31 // pred_check
          %p1216 = pneg %p131
        $region42: #{tpu_custom_call.1} parent=31 // pred_check_branch
          %1218 = sbr.rel (%p1216) target = $region44
        $region43: #{tpu_custom_call.1} parent=31 // pred_region
          %s1219 = smul.u32 4, %s26
          %s1221 = ssub.s32 512, 512
          %1222 = vsyncadd %s1212, %s1221
          %s1223 = smul.addr %s25, 4
          %s1224 = sadd.s32 %s1219, %s1223
          %s1225 = smul.addr %s1224, 128
          %s1226 = scalar_lea.hbm %s3, %s1225
          %s1228 = sshll.u32 %s1215, 4
          %s1229 = int_to_ptr.vmem [resolvable:$true] %s1228
          %1231 = dma.vmem_to_hbm [thread:$0]  %s1229, 512, %s1226, %s1212
        $region44: #{tpu_custom_call.1} parent=31 // pred_fallthru
          _
      $region32: #{tpu_custom_call.1} parent=5 // pred_fallthru
        _
      %p1232 = scmp.le.s32.totalorder 2, %s16
      // Predicated region
      $region45: #{tpu_custom_call.1} parent=5 // pred_check
        %p1233 = pneg %p1232
      $region46: #{tpu_custom_call.1} parent=5 // pred_check_branch
        %1235 = sbr.rel (%p1233) target = $region48
      $region47: #{tpu_custom_call.1} parent=5 // pred_region
        %s1236 = ssub.s32 %s16, 2
        // Predicated region
        $region49: #{tpu_custom_call.1} parent=47 // pred_check
          %p1237 = pneg %p137
        $region50: #{tpu_custom_call.1} parent=47 // pred_check_branch
          %1239 = sbr.rel (%p1237) target = $region52
        $region51: #{tpu_custom_call.1} parent=47 // pred_region
          %s1240 = sand.u32 %s122, 1
          %s1241 = scalar_lea.sflag [#allocation4], %s1240
          %s1242 = sand.u32 %s122, 1
          %s1243 = smul.addr %s1242, 32
          %s1244 = scalar_lea.vmem [#allocation7], %s1243
          %1245 = dma.done %s1241, 512
        $region52: #{tpu_custom_call.1} parent=47 // pred_fallthru
          _
      $region48: #{tpu_custom_call.1} parent=5 // pred_fallthru
        _
    $region6: #{tpu_custom_call.1} parent=1 // loop_footer
      %s20 = sadd.s32 1, %s16
    $region7: #{tpu_custom_call.1} parent=1 // loop_footer_branch
      %15 = sbr.rel target = $region3
    $region8: #{tpu_custom_call.1} parent=1 // loop_exit
      _
    %1246 = vsyncpa [#allocation3], 1
    %s1247 = scalar_lea.sflag [#allocation3], 1
    %1248 = vsyncpa %s1247, 1
    %1249 = vsyncpa [#allocation6], 1
    %1250 = vsyncpa [#allocation4], 1
    %s1251 = scalar_lea.sflag [#allocation4], 1
    %1252 = vsyncpa %s1251, 1

</llo_original>
